<compile_context>
chip_gen: v6e
topology: v6e:2x2x1
jax: 0.10.0
libtpu: 0.0.40
codegen_flags: <defaults>
</compile_context>

<pallas_src>
import functools
import math

import jax
import jax.numpy as jnp
from jax import lax
from jax.experimental import pallas as pl
from jax.experimental.pallas import tpu as pltpu


def _cdiv(a, b):
    return -(-a // b)


def _round_up(x, m):
    return _cdiv(x, m) * m


def _sublane_req(dtype):
    # Native VMEM tile: (8,128) for 4-byte, (16,128) for 2-byte, (32,128) for
    # 1-byte dtypes.
    return max(8, 32 // jnp.dtype(dtype).itemsize)


def _vmem_budget():
    """(resident-data budget, scoped vmem limit) in bytes, per generation."""
    try:
        cap = int(pltpu.get_tpu_info().vmem_capacity_bytes)
    except Exception:
        cap = 64 * 1024 * 1024                    # conservative (v7x per-TC)
    budget = min((3 * cap) // 8, 48 * 1024 * 1024)   # blocks + accumulators
    limit = min(cap // 2, 64 * 1024 * 1024)
    return budget, limit


def _canonical_input(x):
    """Keep HBM reads as narrow as is safe; the kernel accumulates in f32."""
    dt = x.dtype
    if jnp.issubdtype(dt, jnp.floating):
        return x
    if dt == jnp.bool_:
        return x.astype(jnp.int8)   # 1 byte/elem instead of a 4x f32 HBM copy
    if dt in (jnp.dtype(jnp.int8), jnp.dtype(jnp.uint8)):
        return x
    return x.astype(jnp.float32)    # wide ints etc.: safe fallback


def _dice_partial_kernel(p_ref, t_ref, inter_ref, union_ref,
                         inter_acc, union_acc, *,
                         fold_sub, blk_rows, n_valid, m_inner, need_mask):
    """Per-(batch, parallel-slice) partial intersection/union sums.

    Grid = (B, P, m_inner).  Block views:
      folded:  p_ref/t_ref -> (C, SUB, 128); accumulators (C, 128) f32
      flat:    p_ref/t_ref -> (C, T);        accumulators (C, T)   f32
    inter_ref/union_ref -> (C, 1) per (b, p) slice; written once in the
    epilogue (their block index is constant along the arbitrary axis).
    """
    p_id = pl.program_id(1)
    s_id = pl.program_id(2)

    @pl.when(s_id == 0)
    def _():
        inter_acc[...] = jnp.zeros_like(inter_acc)
        union_acc[...] = jnp.zeros_like(union_acc)

    p = p_ref[...].astype(jnp.float32)
    t = t_ref[...].astype(jnp.float32)

    def _accumulate(pp, tt):
        prod = pp * tt
        ssum = pp + tt
        if fold_sub:
            # Reduce the folded sublane axis each step so the resident f32
            # accumulators stay (C, 128): SUBx less accumulator load/store.
            inter_acc[...] += jnp.sum(prod, axis=1)
            union_acc[...] += jnp.sum(ssum, axis=1)
        else:
            inter_acc[...] += prod
            union_acc[...] += ssum

    if not need_mask:
        _accumulate(p, t)
    else:
        # Unclamped block index along the reduced axis; the index_map clamps
        # the DMA, we clamp the contribution here.
        cb = p_id * m_inner + s_id
        valid = n_valid - cb * blk_rows           # valid rows in this block
        full = valid >= blk_rows

        @pl.when(full)
        def _():
            _accumulate(p, t)

        @pl.when(jnp.logical_not(full))
        def _():
            # Mask BEFORE multiply/add so stale/garbage data in the padded
            # region (possibly NaN) cannot poison the sums.
            idx = lax.broadcasted_iota(jnp.int32, p.shape, 1)
            keep = idx < valid
            _accumulate(jnp.where(keep, p, 0.0), jnp.where(keep, t, 0.0))

    @pl.when(s_id == m_inner - 1)
    def _():
        # One cross-lane reduce per (b, p) slice, epilogue only.
        inter_ref[...] = jnp.sum(inter_acc[...], axis=-1, keepdims=True)
        union_ref[...] = jnp.sum(union_acc[...], axis=-1, keepdims=True)


@functools.partial(
    jax.jit,
    static_argnames=("smooth", "sub_tile", "flat_tile", "force_flat"))
def dice_score(y_pred, y_true, smooth: float = 1.0,
               sub_tile=None, flat_tile=None, force_flat=False):
    assert y_pred.shape == y_true.shape, (
        f"y_pred.shape: {y_pred.shape}, y_true.shape: {y_true.shape}")
    assert y_pred.ndim == 6, "expects 6-D (B, C, S1, S2, S3, S4) inputs"
    B, C = y_pred.shape[:2]
    S = math.prod(y_pred.shape[2:])

    # Free reshapes only (collapse trailing dims) + narrow-dtype passthrough.
    p = _canonical_input(y_pred.reshape(B, C, S))
    t = _canonical_input(y_true.reshape(B, C, S))
    p_item = p.dtype.itemsize
    t_item = t.dtype.itemsize

    budget, vmem_limit = _vmem_budget()
    LANE = 128

    # ---- layout selection ---------------------------------------------------
    sub_align = max(_sublane_req(p.dtype), _sublane_req(t.dtype))
    folded = (not force_flat) and S >= LANE and (S % LANE == 0)
    if folded:
        n_chunks = S // LANE
        acc_bytes = 2 * _round_up(C, 8) * LANE * 4
        per_sub = 2 * C * LANE * (p_item + t_item)       # 2 pipeline buffers
        if acc_bytes + per_sub * min(sub_align, n_chunks) > budget:
            folded = False                               # pathological C

    if folded:
        if sub_tile is not None:
            sub = min(n_chunks, _round_up(int(sub_tile), sub_align))
        else:
            sub_cap = max(sub_align, (budget - acc_bytes) // per_sub)
            # Keep a single input block <= ~8 MiB for pipeline granularity.
            sub_cap = min(sub_cap,
                          max(sub_align,
                              (8 << 20) // (C * LANE * max(p_item, t_item))))
            if n_chunks <= sub_cap:
                sub = n_chunks
            else:
                sub = max(sub_align, (sub_cap // sub_align) * sub_align)
        blk_rows, n_valid = sub, n_chunks
        m = _cdiv(n_chunks, sub)
        arr_p = p.reshape(B, C, n_chunks, LANE)          # free reshape
        arr_t = t.reshape(B, C, n_chunks, LANE)
        acc_shape = (C, LANE)
    else:
        # Flat fallback (ragged S): (B, C, S) with a wide lane tile.
        crow_p = _round_up(C, _sublane_req(p.dtype))
        crow_t = _round_up(C, _sublane_req(t.dtype))
        per_lane = (2 * (crow_p * p_item + crow_t * t_item)
                    + 2 * _round_up(C, 8) * 4)
        if flat_tile is not None:
            tile = int(flat_tile)
            tile = S if tile >= S else max(LANE, (tile // LANE) * LANE)
        else:
            lane_cap = max(LANE, min(budget // per_lane, 64 * 1024))
            tile = S if S <= lane_cap else (lane_cap // LANE) * LANE
        blk_rows, n_valid = tile, S
        m = _cdiv(S, tile)
        arr_p, arr_t = p, t
        acc_shape = (C, tile)

    # ---- parallel split of the reduced axis (keeps both v7x TCs busy) -------
    par = 2 if (B % 2 == 1 and m >= 2) else 1
    m_inner = _cdiv(m, par)
    need_mask = (n_valid % blk_rows != 0) or (par * m_inner != m)
    need_clamp = (par * m_inner != m)
    last_block = m - 1

    if folded:
        def in_map(b, pp, s):
            cb = pp * m_inner + s
            if need_clamp:
                cb = jnp.minimum(cb, last_block)
            return (b, 0, cb, 0)
        in_specs = [pl.BlockSpec((None, C, blk_rows, LANE), in_map),
                    pl.BlockSpec((None, C, blk_rows, LANE), in_map)]
    else:
        def in_map(b, pp, s):
            cb = pp * m_inner + s
            if need_clamp:
                cb = jnp.minimum(cb, last_block)
            return (b, 0, cb)
        in_specs = [pl.BlockSpec((None, C, blk_rows), in_map),
                    pl.BlockSpec((None, C, blk_rows), in_map)]

    out_specs = [pl.BlockSpec((None, None, C, 1), lambda b, pp, s: (b, pp, 0, 0)),
                 pl.BlockSpec((None, None, C, 1), lambda b, pp, s: (b, pp, 0, 0))]

    kernel = functools.partial(
        _dice_partial_kernel, fold_sub=folded, blk_rows=blk_rows,
        n_valid=n_valid, m_inner=m_inner, need_mask=need_mask)

    cost = pl.CostEstimate(
        flops=3 * B * C * S,
        transcendentals=0,
        bytes_accessed=B * C * S * (p_item + t_item) + 2 * B * par * C * 4,
    )

    inter_part, union_part = pl.pallas_call(
        kernel,
        out_shape=(jax.ShapeDtypeStruct((B, par, C, 1), jnp.float32),
                   jax.ShapeDtypeStruct((B, par, C, 1), jnp.float32)),
        grid_spec=pltpu.PrefetchScalarGridSpec(
            num_scalar_prefetch=0,
            grid=(B, par, m_inner),
            in_specs=in_specs,
            out_specs=out_specs,
            scratch_shapes=[pltpu.VMEM(acc_shape, jnp.float32),
                            pltpu.VMEM(acc_shape, jnp.float32)],
        ),
        compiler_params=pltpu.CompilerParams(
            dimension_semantics=("parallel", "parallel", "arbitrary"),
            vmem_limit_bytes=vmem_limit,
        ),
        cost_estimate=cost,
    )(arr_p, arr_t)

    # Tiny (B, P, C) combine + smooth/divide in XLA (negligible).
    inter = jnp.sum(inter_part[:, :, :, 0], axis=(0, 1))
    union = jnp.sum(union_part[:, :, :, 0], axis=(0, 1))
    dice = (2.0 * inter + float(smooth)) / (union + float(smooth))
    return dice.mean(), dice


def _reference(y_pred, y_true, smooth=1.0):
    y_pred = y_pred.astype(jnp.float32)
    y_true = y_true.astype(jnp.float32)
    inter = jnp.sum(y_pred * y_true, axis=(0, 2, 3, 4, 5))
    union = jnp.sum(y_pred + y_true, axis=(0, 2, 3, 4, 5))
    dice = (2.0 * inter + smooth) / (union + smooth)
    return dice.mean(), dice


if __name__ == "__main__":
    key = jax.random.PRNGKey(0)
    ks = jax.random.split(key, 8)

    # ---- Test 1: aligned inputs -> folded sublane layout, single block. -----
    B, C = 2, 4
    shape1 = (B, C, 4, 4, 4, 8)                       # S = 512 = 4*128
    y_pred1 = jax.nn.sigmoid(jax.random.normal(ks[0], shape1, jnp.float32))
    y_true1 = (jax.random.uniform(ks[1], shape1) > 0.5).astype(jnp.float32)

    mean_d, pc_d = dice_score(y_pred1, y_true1, smooth=1.0)
    jax.block_until_ready((mean_d, pc_d))
    ref_mean, ref_pc = _reference(y_pred1, y_true1, smooth=1.0)
    assert pc_d.shape == (C,)
    assert jnp.allclose(pc_d, ref_pc, atol=1e-5, rtol=1e-4)
    assert jnp.allclose(mean_d, ref_mean, atol=1e-5, rtol=1e-4)

    # ---- Test 2: folded layout with a ragged chunk tail, forced small SUB,
    # and B=1 -> extra parallel split (P=2) + clamped out-of-range blocks. ----
    shape2 = (1, 3, 4, 5, 8, 16)                      # S = 2560 = 20*128
    y_pred2 = jax.nn.sigmoid(jax.random.normal(ks[2], shape2, jnp.float32))
    y_true2 = (jax.random.uniform(ks[3], shape2) > 0.5).astype(jnp.float32)

    mean2, pc2 = dice_score(y_pred2, y_true2, smooth=1.0, sub_tile=8)
    jax.block_until_ready((mean2, pc2))
    rmean2, rpc2 = _reference(y_pred2, y_true2, smooth=1.0)
    assert jnp.allclose(pc2, rpc2, atol=1e-5, rtol=1e-4)
    assert jnp.allclose(mean2, rmean2, atol=1e-5, rtol=1e-4)

    # ---- Test 3: ragged S (315, not a multiple of 128) -> flat fallback with
    # a forced small lane tile to exercise in-kernel tail masking. ------------
    shape3 = (2, 4, 5, 7, 3, 3)                       # S = 315
    y_pred3 = jax.nn.sigmoid(jax.random.normal(ks[4], shape3, jnp.float32))
    y_true3 = (jax.random.uniform(ks[5], shape3) > 0.5).astype(jnp.float32)

    mean3, pc3 = dice_score(y_pred3, y_true3, smooth=1.0, flat_tile=128)
    jax.block_until_ready((mean3, pc3))
    rmean3, rpc3 = _reference(y_pred3, y_true3, smooth=1.0)
    assert jnp.allclose(pc3, rpc3, atol=1e-5, rtol=1e-4)
    assert jnp.allclose(mean3, rmean3, atol=1e-5, rtol=1e-4)

    # ---- Test 4: bf16 predictions + bool mask (passed through as int8). -----
    y_pred4 = y_pred1.astype(jnp.bfloat16)
    y_true4 = jax.random.uniform(ks[6], shape1) > 0.5                  # bool
    mean4, pc4 = dice_score(y_pred4, y_true4, smooth=1.0)
    jax.block_until_ready((mean4, pc4))
    rmean4, rpc4 = _reference(y_pred4, y_true4, smooth=1.0)
    assert jnp.allclose(pc4, rpc4, atol=1e-4, rtol=1e-3)
    assert jnp.allclose(mean4, rmean4, atol=1e-4, rtol=1e-3)

    print("KERNEL_OK")
</pallas_src>

<mosaic_0001>
module attributes {stable_mosaic.version = 11 : i64} {
  func.func @_dice_partial_kernel(%arg0: i32, %arg1: i32, %arg2: i32, %arg3: memref<1x4x4x128xf32, #tpu.memory_space<vmem>>, %arg4: memref<1x4x4x128xf32, #tpu.memory_space<vmem>>, %arg5: memref<1x1x4x1xf32, #tpu.memory_space<vmem>>, %arg6: memref<1x1x4x1xf32, #tpu.memory_space<vmem>>, %arg7: memref<4x128xf32, #tpu.memory_space<vmem>>, %arg8: memref<4x128xf32, #tpu.memory_space<vmem>>) attributes {dimension_semantics = [#tpu.dimension_semantics<parallel>, #tpu.dimension_semantics<parallel>, #tpu.dimension_semantics<arbitrary>], iteration_bounds = array<i64: 2, 1, 1>, scalar_prefetch = 0 : i64, scratch_operands = 2 : i64, tpu.core_type = #tpu.core_type<tc>, window_params = [{transform_indices = @transform_0, window_bounds = array<i64: 1, 4, 4, 128>}, {transform_indices = @transform_1, window_bounds = array<i64: 1, 4, 4, 128>}, {transform_indices = @transform_2, window_bounds = array<i64: 1, 1, 4, 1>}, {transform_indices = @transform_3, window_bounds = array<i64: 1, 1, 4, 1>}]} {
    %c0_i32 = arith.constant 0 : i32
    %0 = arith.cmpi eq, %arg2, %c0_i32 : i32
    %1 = arith.extui %0 : i1 to i32
    %c0_i32_0 = arith.constant 0 : i32
    %2 = arith.cmpi ne, %1, %c0_i32_0 : i32
    scf.if %2 {
      %cst_19 = arith.constant 0.000000e+00 : f32
      %20 = vector.broadcast %cst_19 : f32 to vector<4x128xf32>
      %c0_20 = arith.constant 0 : index
      %c0_21 = arith.constant 0 : index
      %21 = vector.load %arg7[%c0_20, %c0_21] : memref<4x128xf32, #tpu.memory_space<vmem>>, vector<4x128xf32>
      tpu.vector_store %arg7[%c0_20, %c0_21], %20 {strides = array<i32>} : memref<4x128xf32, #tpu.memory_space<vmem>>, vector<4x128xf32>,
      %cst_22 = arith.constant 0.000000e+00 : f32
      %22 = vector.broadcast %cst_22 : f32 to vector<4x128xf32>
      %c0_23 = arith.constant 0 : index
      %c0_24 = arith.constant 0 : index
      %23 = vector.load %arg8[%c0_23, %c0_24] : memref<4x128xf32, #tpu.memory_space<vmem>>, vector<4x128xf32>
      tpu.vector_store %arg8[%c0_23, %c0_24], %22 {strides = array<i32>} : memref<4x128xf32, #tpu.memory_space<vmem>>, vector<4x128xf32>,
    } else {
    }
    %c0 = arith.constant 0 : index
    %c0_1 = arith.constant 0 : index
    %c0_2 = arith.constant 0 : index
    %c0_3 = arith.constant 0 : index
    %3 = vector.load %arg3[%c0, %c0_1, %c0_2, %c0_3] : memref<1x4x4x128xf32, #tpu.memory_space<vmem>>, vector<1x4x4x128xf32>
    %4 = vector.shape_cast %3 : vector<1x4x4x128xf32> to vector<4x4x128xf32>
    %c0_4 = arith.constant 0 : index
    %c0_5 = arith.constant 0 : index
    %c0_6 = arith.constant 0 : index
    %c0_7 = arith.constant 0 : index
    %5 = vector.load %arg4[%c0_4, %c0_5, %c0_6, %c0_7] : memref<1x4x4x128xf32, #tpu.memory_space<vmem>>, vector<1x4x4x128xf32>
    %6 = vector.shape_cast %5 : vector<1x4x4x128xf32> to vector<4x4x128xf32>
    %7 = arith.mulf %4, %6 : vector<4x4x128xf32>
    %8 = arith.addf %4, %6 : vector<4x4x128xf32>
    %c0_8 = arith.constant 0 : index
    %c0_9 = arith.constant 0 : index
    %9 = vector.load %arg7[%c0_8, %c0_9] : memref<4x128xf32, #tpu.memory_space<vmem>>, vector<4x128xf32>
    %cst = arith.constant dense<0.000000e+00> : vector<4x128xf32>
    %10 = vector.multi_reduction <add>, %7, %cst [1] : vector<4x4x128xf32> to vector<4x128xf32>
    %11 = arith.addf %9, %10 : vector<4x128xf32>
    %c0_10 = arith.constant 0 : index
    %c0_11 = arith.constant 0 : index
    %12 = vector.load %arg7[%c0_10, %c0_11] : memref<4x128xf32, #tpu.memory_space<vmem>>, vector<4x128xf32>
    tpu.vector_store %arg7[%c0_10, %c0_11], %11 {strides = array<i32>} : memref<4x128xf32, #tpu.memory_space<vmem>>, vector<4x128xf32>,
    %c0_12 = arith.constant 0 : index
    %c0_13 = arith.constant 0 : index
    %13 = vector.load %arg8[%c0_12, %c0_13] : memref<4x128xf32, #tpu.memory_space<vmem>>, vector<4x128xf32>
    %cst_14 = arith.constant dense<0.000000e+00> : vector<4x128xf32>
    %14 = vector.multi_reduction <add>, %8, %cst_14 [1] : vector<4x4x128xf32> to vector<4x128xf32>
    %15 = arith.addf %13, %14 : vector<4x128xf32>
    %c0_15 = arith.constant 0 : index
    %c0_16 = arith.constant 0 : index
    %16 = vector.load %arg8[%c0_15, %c0_16] : memref<4x128xf32, #tpu.memory_space<vmem>>, vector<4x128xf32>
    tpu.vector_store %arg8[%c0_15, %c0_16], %15 {strides = array<i32>} : memref<4x128xf32, #tpu.memory_space<vmem>>, vector<4x128xf32>,
    %c0_i32_17 = arith.constant 0 : i32
    %17 = arith.cmpi eq, %arg2, %c0_i32_17 : i32
    %18 = arith.extui %17 : i1 to i32
    %c0_i32_18 = arith.constant 0 : i32
    %19 = arith.cmpi ne, %18, %c0_i32_18 : i32
    scf.if %19 {
      %c0_19 = arith.constant 0 : index
      %c0_20 = arith.constant 0 : index
      %20 = vector.load %arg7[%c0_19, %c0_20] : memref<4x128xf32, #tpu.memory_space<vmem>>, vector<4x128xf32>
      %cst_21 = arith.constant dense<0.000000e+00> : vector<4xf32>
      %21 = vector.multi_reduction <add>, %20, %cst_21 [1] : vector<4x128xf32> to vector<4xf32>
      %22 = vector.shape_cast %21 : vector<4xf32> to vector<4x1xf32>
      %c0_22 = arith.constant 0 : index
      %c0_23 = arith.constant 0 : index
      %c0_24 = arith.constant 0 : index
      %c0_25 = arith.constant 0 : index
      %23 = vector.load %arg5[%c0_22, %c0_23, %c0_24, %c0_25] : memref<1x1x4x1xf32, #tpu.memory_space<vmem>>, vector<1x1x4x1xf32>
      %24 = vector.shape_cast %23 : vector<1x1x4x1xf32> to vector<4x1xf32>
      %25 = vector.shape_cast %22 : vector<4x1xf32> to vector<1x1x4x1xf32>
      tpu.vector_store %arg5[%c0_22, %c0_23, %c0_24, %c0_25], %25 {strides = array<i32>} : memref<1x1x4x1xf32, #tpu.memory_space<vmem>>, vector<1x1x4x1xf32>,
      %c0_26 = arith.constant 0 : index
      %c0_27 = arith.constant 0 : index
      %26 = vector.load %arg8[%c0_26, %c0_27] : memref<4x128xf32, #tpu.memory_space<vmem>>, vector<4x128xf32>
      %cst_28 = arith.constant dense<0.000000e+00> : vector<4xf32>
      %27 = vector.multi_reduction <add>, %26, %cst_28 [1] : vector<4x128xf32> to vector<4xf32>
      %28 = vector.shape_cast %27 : vector<4xf32> to vector<4x1xf32>
      %c0_29 = arith.constant 0 : index
      %c0_30 = arith.constant 0 : index
      %c0_31 = arith.constant 0 : index
      %c0_32 = arith.constant 0 : index
      %29 = vector.load %arg6[%c0_29, %c0_30, %c0_31, %c0_32] : memref<1x1x4x1xf32, #tpu.memory_space<vmem>>, vector<1x1x4x1xf32>
      %30 = vector.shape_cast %29 : vector<1x1x4x1xf32> to vector<4x1xf32>
      %31 = vector.shape_cast %28 : vector<4x1xf32> to vector<1x1x4x1xf32>
      tpu.vector_store %arg6[%c0_29, %c0_30, %c0_31, %c0_32], %31 {strides = array<i32>} : memref<1x1x4x1xf32, #tpu.memory_space<vmem>>, vector<1x1x4x1xf32>,
    } else {
    }
    return
  }
  func.func @transform_0(%arg0: i32, %arg1: i32, %arg2: i32) -> (i32, i32, i32, i32) {
    %c1_i32 = arith.constant 1 : i32
    %0 = arith.muli %arg1, %c1_i32 : i32
    %1 = arith.addi %0, %arg2 : i32
    %c0_i32 = arith.constant 0 : i32
    %c0_i32_0 = arith.constant 0 : i32
    %c0_i32_1 = arith.constant 0 : i32
    return %arg0, %c0_i32, %1, %c0_i32_0 : i32, i32, i32, i32
  }
  func.func @transform_1(%arg0: i32, %arg1: i32, %arg2: i32) -> (i32, i32, i32, i32) {
    %c1_i32 = arith.constant 1 : i32
    %0 = arith.muli %arg1, %c1_i32 : i32
    %1 = arith.addi %0, %arg2 : i32
    %c0_i32 = arith.constant 0 : i32
    %c0_i32_0 = arith.constant 0 : i32
    %c0_i32_1 = arith.constant 0 : i32
    return %arg0, %c0_i32, %1, %c0_i32_0 : i32, i32, i32, i32
  }
  func.func @transform_2(%arg0: i32, %arg1: i32, %arg2: i32) -> (i32, i32, i32, i32) {
    %c0_i32 = arith.constant 0 : i32
    %c0_i32_0 = arith.constant 0 : i32
    %c0_i32_1 = arith.constant 0 : i32
    return %arg0, %arg1, %c0_i32, %c0_i32_0 : i32, i32, i32, i32
  }
  func.func @transform_3(%arg0: i32, %arg1: i32, %arg2: i32) -> (i32, i32, i32, i32) {
    %c0_i32 = arith.constant 0 : i32
    %c0_i32_0 = arith.constant 0 : i32
    %c0_i32_1 = arith.constant 0 : i32
    return %arg0, %arg1, %c0_i32, %c0_i32_0 : i32, i32, i32, i32
  }
}

</mosaic_0001>

<llo_original>
// kernel: dice_score.1
$region0: #{dice_score.1}
  #allocation0 [shape = 'u32[]', space=smem, size = 0x4, offset = 0x4, fixed_abs, tag = 'smem constant byte address 0x4 - core index']
  #allocation1 [shape = 'u32[144,128]{1,0:T(1,128)}', space=vmem, size = 0x12000, scoped, tag = 'internal scratch']
  #allocation2 [shape = 'f32[4,128]{1,0:T(4,128)}', space=vmem, size = 0x800, scoped, tag = 'scratch operand']
  #allocation3 [shape = 'f32[4,128]{1,0:T(4,128)}', space=vmem, size = 0x800, scoped, tag = 'scratch operand']
  %s0 = inlined_call_operand.vmem [shape: f32[2,4,4,128], index: 0, kind: input, shape index: {}]
  %s1 = inlined_call_operand.vmem [shape: f32[2,4,4,128], index: 1, kind: input, shape index: {}]
  %s2 = inlined_call_operand.vmem [shape: f32[2,1,4,1], index: 2, kind: output, shape index: {0}]
  %s3 = inlined_call_operand.vmem [shape: f32[2,1,4,1], index: 3, kind: output, shape index: {1}]
  %4 = xla_tuple %s2, %s3
  %s5 = sld [smem:[#allocation0]]
  $region57: #{dice_score.1} parent=0
    _
  %s7 = ssub.s32 1, %s5
  %s8 = scalar_select 0, %s7, %s5
  loop: start=0, step=1, limit=4
  $region2: #{dice_score.1} parent=0 // loop_pre_header
    _
  $region3: #{dice_score.1} parent=0 // loop_header
    %s10 = sphi 0, %s14
    %p11 = scmp.ge.s32.totalorder %s10, 4
    %s17 = sphi 0, %s36
    %s18 = sphi 0, %s32
    %s19 = sphi 0, %s28
    %s20 = sphi 0, %s17
    %s21 = sphi 0, %s18
    %s22 = sphi 0, %s19
    %s23 = sphi 0, %s20
    %s24 = sphi 0, %s21
    %s25 = sphi 0, %s22
    %s43 = sphi 0, %s45
    %s46 = sphi 0, %s43
    %s47 = sphi 0, %s46
    %s63 = sphi 0, %s47
    %s73 = sphi 0, %s75
    %s76 = sphi 0, %s73
    %s77 = sphi 0, %s76
    %s93 = sphi 0, %s77
    %s101 = sphi 0, %s103
    %s104 = sphi 0, %s101
    %s105 = sphi 0, %s104
    %s121 = sphi 0, %s105
    %s129 = sphi 0, %s131
    %s132 = sphi 0, %s129
    %s133 = sphi 0, %s132
    %s149 = sphi 0, %s133
  $region4: #{dice_score.1} parent=0 // loop_header_branch
    %13 = sbr.rel (%p11) target = $region8
  $region5: #{dice_score.1} parent=0 // loop_body
    %s15 = ssub.s32 %s10, 1
    %s16 = ssub.s32 %s10, 2
    %s26 = sadd.s32 1, %s19
    %p27 = scmp.ge.s32.totalorder %s26, 1
    %s28 = scalar_select %p27, 0, %s26
    %s29 = sadd.s32 1, %s18
    %s30 = scalar_select %p27, %s29, %s18
    %p31 = scmp.ge.s32.totalorder %s30, 1
    %s32 = scalar_select %p31, 0, %s30
    %s33 = sadd.s32 1, %s17
    %s34 = scalar_select %p31, %s33, %s17
    %p35 = scmp.ge.s32.totalorder %s34, 2
    %s36 = scalar_select %p35, 0, %s34
    %s37 = sadd.s32 %s18, %s19
    %s38 = sadd.s32 %s32, %s28
    %s39 = ssub.s32 %s17, %s36
    %s40 = ssub.s32 %s37, %s38
    %s41 = sor.u32 %s39, %s40
    %p42 = scmp.eq.s32.totalorder %s41, 0
    %s44 = sadd.s32 %s43, 1
    %s45 = scalar_select %p42, %s43, %s44
    %p48 = pneg %p42
    %p49 = scmp.eq.s32.totalorder %s10, 1
    %p50 = por %p48, %p49
    %p51 = scmp.ne.s32.totalorder %s43, %s46
    %p52 = scmp.eq.s32.totalorder %s10, 0
    %p53 = por %p51, %p52
    %p54 = scmp.ne.s32.totalorder %s43, %s46
    %p55 = scmp.eq.s32.totalorder %s15, 1
    %p56 = por %p54, %p55
    %p57 = scmp.ne.s32.totalorder %s46, %s47
    %p58 = scmp.eq.s32.totalorder %s15, 0
    %p59 = por %p57, %p58
    %p60 = scmp.ne.s32.totalorder %s46, %s47
    %p61 = scmp.eq.s32.totalorder %s16, 1
    %p62 = por %p60, %p61
    %p64 = scmp.ne.s32.totalorder %s47, %s63
    %p65 = scmp.eq.s32.totalorder %s16, 0
    %p66 = por %p64, %p65
    %s67 = sadd.s32 %s18, %s19
    %s68 = sadd.s32 %s32, %s28
    %s69 = ssub.s32 %s17, %s36
    %s70 = ssub.s32 %s67, %s68
    %s71 = sor.u32 %s69, %s70
    %p72 = scmp.eq.s32.totalorder %s71, 0
    %s74 = sadd.s32 %s73, 1
    %s75 = scalar_select %p72, %s73, %s74
    %p78 = pneg %p72
    %p79 = scmp.eq.s32.totalorder %s10, 1
    %p80 = por %p78, %p79
    %p81 = scmp.ne.s32.totalorder %s73, %s76
    %p82 = scmp.eq.s32.totalorder %s10, 0
    %p83 = por %p81, %p82
    %p84 = scmp.ne.s32.totalorder %s73, %s76
    %p85 = scmp.eq.s32.totalorder %s15, 1
    %p86 = por %p84, %p85
    %p87 = scmp.ne.s32.totalorder %s76, %s77
    %p88 = scmp.eq.s32.totalorder %s15, 0
    %p89 = por %p87, %p88
    %p90 = scmp.ne.s32.totalorder %s76, %s77
    %p91 = scmp.eq.s32.totalorder %s16, 1
    %p92 = por %p90, %p91
    %p94 = scmp.ne.s32.totalorder %s77, %s93
    %p95 = scmp.eq.s32.totalorder %s16, 0
    %p96 = por %p94, %p95
    %s97 = ssub.s32 %s17, %s36
    %s98 = ssub.s32 %s18, %s32
    %s99 = sor.u32 %s97, %s98
    %p100 = scmp.eq.s32.totalorder %s99, 0
    %s102 = sadd.s32 %s101, 1
    %s103 = scalar_select %p100, %s101, %s102
    %p106 = pneg %p100
    %p107 = scmp.eq.s32.totalorder %s10, 1
    %p108 = por %p106, %p107
    %p109 = scmp.ne.s32.totalorder %s101, %s104
    %p110 = scmp.eq.s32.totalorder %s10, 0
    %p111 = por %p109, %p110
    %p112 = scmp.ne.s32.totalorder %s101, %s104
    %p113 = scmp.eq.s32.totalorder %s15, 1
    %p114 = por %p112, %p113
    %p115 = scmp.ne.s32.totalorder %s104, %s105
    %p116 = scmp.eq.s32.totalorder %s15, 0
    %p117 = por %p115, %p116
    %p118 = scmp.ne.s32.totalorder %s104, %s105
    %p119 = scmp.eq.s32.totalorder %s16, 1
    %p120 = por %p118, %p119
    %p122 = scmp.ne.s32.totalorder %s105, %s121
    %p123 = scmp.eq.s32.totalorder %s16, 0
    %p124 = por %p122, %p123
    %s125 = ssub.s32 %s17, %s36
    %s126 = ssub.s32 %s18, %s32
    %s127 = sor.u32 %s125, %s126
    %p128 = scmp.eq.s32.totalorder %s127, 0
    %s130 = sadd.s32 %s129, 1
    %s131 = scalar_select %p128, %s129, %s130
    %p134 = pneg %p128
    %p135 = scmp.eq.s32.totalorder %s10, 1
    %p136 = por %p134, %p135
    %p137 = scmp.ne.s32.totalorder %s129, %s132
    %p138 = scmp.eq.s32.totalorder %s10, 0
    %p139 = por %p137, %p138
    %p140 = scmp.ne.s32.totalorder %s129, %s132
    %p141 = scmp.eq.s32.totalorder %s15, 1
    %p142 = por %p140, %p141
    %p143 = scmp.ne.s32.totalorder %s132, %s133
    %p144 = scmp.eq.s32.totalorder %s15, 0
    %p145 = por %p143, %p144
    %p146 = scmp.ne.s32.totalorder %s132, %s133
    %p147 = scmp.eq.s32.totalorder %s16, 1
    %p148 = por %p146, %p147
    %p150 = scmp.ne.s32.totalorder %s133, %s149
    %p151 = scmp.eq.s32.totalorder %s16, 0
    %p152 = por %p150, %p151
    %p153 = scmp.le.s32.totalorder 1, %s10
    %p154 = scmp.lt.s32.totalorder %s10, 3
    %p155 = pnand %p153, %p154
    %p156 = pneg %p155
    // Predicated region
    $region9: #{dice_score.1} parent=5 // pred_check
      _
    $region10: #{dice_score.1} parent=5 // pred_check_branch
      %158 = sbr.rel (%p155) target = $region12
    $region11: #{dice_score.1} parent=5 // pred_region
      %s159 = ssub.s32 %s10, 1
    $region12: #{dice_score.1} parent=5 // pred_fallthru
      _
    %p160 = scmp.lt.s32.totalorder %s10, 2
    // Predicated region
    $region13: #{dice_score.1} parent=5 // pred_check
      %p161 = pneg %p160
    $region14: #{dice_score.1} parent=5 // pred_check_branch
      %163 = sbr.rel (%p161) target = $region16
    $region15: #{dice_score.1} parent=5 // pred_region
      // Predicated region
      $region17: #{dice_score.1} parent=15 // pred_check
        %p164 = pneg %p53
      $region18: #{dice_score.1} parent=15 // pred_check_branch
        %166 = sbr.rel (%p164) target = $region20
      $region19: #{dice_score.1} parent=15 // pred_region
        %s167 = sadd.s32 %s18, %s19
        %p168 = scmp.lt.s32.totalorder %s17, 1
        %s169 = scalar_select %p168, %s17, 1
        %p170 = scmp.lt.s32.totalorder %s167, 0
        %s171 = scalar_select %p170, %s167, 0
        %s172 = smul.addr %s169, 4
        %s173 = sadd.s32 %s171, %s172
        %s174 = smul.addr %s173, 4
        %s175 = scalar_lea.vmem %s0, %s174
        %s176 = sadd.s32 %s18, %s19
      $region20: #{dice_score.1} parent=15 // pred_fallthru
        _
      // Predicated region
      $region21: #{dice_score.1} parent=15 // pred_check
        %p177 = pneg %p83
      $region22: #{dice_score.1} parent=15 // pred_check_branch
        %179 = sbr.rel (%p177) target = $region24
      $region23: #{dice_score.1} parent=15 // pred_region
        %s180 = sadd.s32 %s18, %s19
        %p181 = scmp.lt.s32.totalorder %s17, 1
        %s182 = scalar_select %p181, %s17, 1
        %p183 = scmp.lt.s32.totalorder %s180, 0
        %s184 = scalar_select %p183, %s180, 0
        %s185 = smul.addr %s182, 4
        %s186 = sadd.s32 %s184, %s185
        %s187 = smul.addr %s186, 4
        %s188 = scalar_lea.vmem %s1, %s187
        %s189 = sadd.s32 %s18, %s19
      $region24: #{dice_score.1} parent=15 // pred_fallthru
        _
    $region16: #{dice_score.1} parent=5 // pred_fallthru
      _
    %p190 = scmp.le.s32.totalorder 1, %s10
    %p191 = scmp.lt.s32.totalorder %s10, 3
    %p192 = pnand %p190, %p191
    %p193 = pneg %p192
    // Predicated region
    $region25: #{dice_score.1} parent=5 // pred_check
      _
    $region26: #{dice_score.1} parent=5 // pred_check_branch
      %195 = sbr.rel (%p192) target = $region28
    $region27: #{dice_score.1} parent=5 // pred_region
      %s196 = ssub.s32 %s10, 1
      %s197 = sadd.s32 %s21, %s22
      %p198 = scmp.lt.s32.totalorder %s20, 1
      %s199 = scalar_select %p198, %s20, 1
      %p200 = scmp.lt.s32.totalorder %s197, 0
      %s201 = scalar_select %p200, %s197, 0
      %s202 = smul.addr %s199, 4
      %s203 = sadd.s32 %s201, %s202
      %s204 = smul.addr %s203, 4
      %s205 = scalar_lea.vmem %s0, %s204
      %p206 = pneg %p59
      %p207 = pneg %p56
      %s208 = sadd.s32 %s21, %s22
      %p209 = scmp.lt.s32.totalorder %s20, 1
      %s210 = scalar_select %p209, %s20, 1
      %p211 = scmp.lt.s32.totalorder %s208, 0
      %s212 = scalar_select %p211, %s208, 0
      %s213 = smul.addr %s210, 4
      %s214 = sadd.s32 %s212, %s213
      %s215 = smul.addr %s214, 4
      %s216 = scalar_lea.vmem %s1, %s215
      %p217 = pneg %p89
      %p218 = pneg %p86
      %p219 = pneg %p117
      %p220 = pneg %p114
      %p221 = scmp.lt.s32.totalorder %s20, 1
      %s222 = scalar_select %p221, %s20, 1
      %p223 = scmp.lt.s32.totalorder %s21, 0
      %s224 = scalar_select %p223, %s21, 0
      %s225 = sadd.s32 %s224, %s222
      %s226 = smul.addr %s225, 4
      %s227 = scalar_lea.vmem %s2, %s226
      %p228 = pneg %p145
      %p229 = pneg %p142
      %p230 = scmp.lt.s32.totalorder %s20, 1
      %s231 = scalar_select %p230, %s20, 1
      %p232 = scmp.lt.s32.totalorder %s21, 0
      %s233 = scalar_select %p232, %s21, 0
      %s234 = sadd.s32 %s233, %s231
      %s235 = smul.addr %s234, 4
      %s236 = scalar_lea.vmem %s3, %s235
      %s237 = sadd.s32 %s21, %s22
      %p238 = scmp.lt.s32.totalorder %s20, 1
      %s239 = scalar_select %p238, %s20, 1
      %p240 = scmp.lt.s32.totalorder %s237, 0
      %s241 = scalar_select %p240, %s237, 0
      %s242 = smul.addr %s239, 4
      %s243 = sadd.s32 %s241, %s242
      %s244 = smul.addr %s243, 4
      %s245 = scalar_lea.vmem %s0, %s244
      %s246 = sadd.s32 %s21, %s22
      %s247 = sadd.s32 %s21, %s22
      %p248 = scmp.lt.s32.totalorder %s20, 1
      %s249 = scalar_select %p248, %s20, 1
      %p250 = scmp.lt.s32.totalorder %s247, 0
      %s251 = scalar_select %p250, %s247, 0
      %s252 = smul.addr %s249, 4
      %s253 = sadd.s32 %s251, %s252
      %s254 = smul.addr %s253, 4
      %s255 = scalar_lea.vmem %s1, %s254
      %s256 = sadd.s32 %s21, %s22
      %p257 = scmp.lt.s32.totalorder %s20, 1
      %s258 = scalar_select %p257, %s20, 1
      %p259 = scmp.lt.s32.totalorder %s21, 0
      %s260 = scalar_select %p259, %s21, 0
      %s261 = sadd.s32 %s260, %s258
      %s262 = smul.addr %s261, 4
      %s263 = scalar_lea.vmem %s2, %s262
      %p264 = scmp.lt.s32.totalorder %s20, 1
      %s265 = scalar_select %p264, %s20, 1
      %p266 = scmp.lt.s32.totalorder %s21, 0
      %s267 = scalar_select %p266, %s21, 0
      %s268 = sadd.s32 %s267, %s265
      %s269 = smul.addr %s268, 4
      %s270 = scalar_lea.vmem %s3, %s269
      %p271 = scmp.eq.s32.totalorder %s22, 0
      // Predicated region
      $region29: #{dice_score.1} parent=27 // pred_check
        %p272 = pneg %p271
      $region30: #{dice_score.1} parent=27 // pred_check_branch
        %274 = sbr.rel (%p272) target = $region32
      $region31: #{dice_score.1} parent=27 // pred_region
        %275 = vst [vmem:[#allocation2] sm:$0xf] 0.0
        %276 = vst [vmem:[#allocation3] sm:$0xf] 0.0
      $region32: #{dice_score.1} parent=27 // pred_fallthru
        _
      %v277 = vld [vmem:[%s245] sm:$0xf]
      %v278 = vld [vmem:[%s245 + $0x4] sm:$0xf]
      %v279 = vld [vmem:[%s245 + $0x8] sm:$0xf]
      %v280 = vld [vmem:[%s245 + $0xc] sm:$0xf]
      %v281 = vld [vmem:[%s255] sm:$0xf]
      %v282 = vld [vmem:[%s255 + $0x4] sm:$0xf]
      %v283 = vld [vmem:[%s255 + $0x8] sm:$0xf]
      %v284 = vld [vmem:[%s255 + $0xc] sm:$0xf]
      %v285 = vmul.f32 %v277, %v281
      %v286 = vmul.f32 %v278, %v282
      %v287 = vmul.f32 %v279, %v283
      %v288 = vmul.f32 %v280, %v284
      %v289 = vadd.f32 %v277, %v281
      %v290 = vadd.f32 %v278, %v282
      %v291 = vadd.f32 %v279, %v283
      %v292 = vadd.f32 %v280, %v284
      %v293 = vld [vmem:[#allocation2] sm:$0xf]
      %vm294 = vcmask 1043456
      %v295 = vsel %vm294, %v285, 0.0
      %v296 = vrot.slane %v295, 4
      %v297 = vadd.f32 %v295, %v296
      %v298 = vrot.slane %v297, 2
      %v299 = vadd.f32 %v297, %v298
      %v300 = vrot.slane %v299, 1
      %v301 = vadd.f32 %v299, %v300
      %v302 = vsel %vm294, %v286, 0.0
      %v303 = vrot.slane %v302, 4
      %v304 = vadd.f32 %v302, %v303
      %v305 = vrot.slane %v304, 2
      %v306 = vadd.f32 %v304, %v305
      %v307 = vrot.slane %v306, 1
      %v308 = vadd.f32 %v306, %v307
      %v309 = vsel %vm294, %v287, 0.0
      %v310 = vrot.slane %v309, 4
      %v311 = vadd.f32 %v309, %v310
      %v312 = vrot.slane %v311, 2
      %v313 = vadd.f32 %v311, %v312
      %v314 = vrot.slane %v313, 1
      %v315 = vadd.f32 %v313, %v314
      %v316 = vsel %vm294, %v288, 0.0
      %v317 = vrot.slane %v316, 4
      %v318 = vadd.f32 %v316, %v317
      %v319 = vrot.slane %v318, 2
      %v320 = vadd.f32 %v318, %v319
      %v321 = vrot.slane %v320, 1
      %v322 = vadd.f32 %v320, %v321
      %vm327 = vcmask 1041409
      %v328 = vsel %vm327, %v308, %v301
      %vm329 = vcmask 1042434
      %v330 = vsel %vm329, %v315, %v328
      %vm331 = vcmask 1043459
      %v332 = vsel %vm331, %v322, %v330
      %v334 = vadd.f32 %v293, %v332
      %335 = vst [vmem:[#allocation2] sm:$0xf] %v334
      %v336 = vld [vmem:[#allocation3] sm:$0xf]
      %v337 = vsel %vm294, %v289, 0.0
      %v338 = vrot.slane %v337, 4
      %v339 = vadd.f32 %v337, %v338
      %v340 = vrot.slane %v339, 2
      %v341 = vadd.f32 %v339, %v340
      %v342 = vrot.slane %v341, 1
      %v343 = vadd.f32 %v341, %v342
      %v344 = vsel %vm294, %v290, 0.0
      %v345 = vrot.slane %v344, 4
      %v346 = vadd.f32 %v344, %v345
      %v347 = vrot.slane %v346, 2
      %v348 = vadd.f32 %v346, %v347
      %v349 = vrot.slane %v348, 1
      %v350 = vadd.f32 %v348, %v349
      %v351 = vsel %vm294, %v291, 0.0
      %v352 = vrot.slane %v351, 4
      %v353 = vadd.f32 %v351, %v352
      %v354 = vrot.slane %v353, 2
      %v355 = vadd.f32 %v353, %v354
      %v356 = vrot.slane %v355, 1
      %v357 = vadd.f32 %v355, %v356
      %v358 = vsel %vm294, %v292, 0.0
      %v359 = vrot.slane %v358, 4
      %v360 = vadd.f32 %v358, %v359
      %v361 = vrot.slane %v360, 2
      %v362 = vadd.f32 %v360, %v361
      %v363 = vrot.slane %v362, 1
      %v364 = vadd.f32 %v362, %v363
      %v369 = vsel %vm327, %v350, %v343
      %v370 = vsel %vm329, %v357, %v369
      %v371 = vsel %vm331, %v364, %v370
      %v373 = vadd.f32 %v336, %v371
      %374 = vst [vmem:[#allocation3] sm:$0xf] %v373
      // Predicated region
      $region33: #{dice_score.1} parent=27 // pred_check
        %p375 = pneg %p271
      $region34: #{dice_score.1} parent=27 // pred_check_branch
        %377 = sbr.rel (%p375) target = $region36
      $region35: #{dice_score.1} parent=27 // pred_region
        %v378 = vld [vmem:[#allocation2] sm:$0xf]
        %v379 = vsel %vm294, %v378, 0.0
        %380 = vadd.xlane.f32.xlu0 %v379
        %v381 = vpop.xlane.xlu0 %380
        %vm382 = vcmask 3072
        %383 = vst.msk [vmem:[%s263] sm:$0xf] %vm382, %v381
        %v384 = vld [vmem:[#allocation3] sm:$0xf]
        %v385 = vsel %vm294, %v384, 0.0
        %386 = vadd.xlane.f32.xlu0 %v385
        %v387 = vpop.xlane.xlu0 %386
        %388 = vst.msk [vmem:[%s270] sm:$0xf] %vm382, %v387
      $region36: #{dice_score.1} parent=27 // pred_fallthru
        _
      %p389 = scmp.lt.s32.totalorder %s20, 1
      %s390 = scalar_select %p389, %s20, 1
      %p391 = scmp.lt.s32.totalorder %s21, 0
      %s392 = scalar_select %p391, %s21, 0
      %s393 = sadd.s32 %s392, %s390
      %s394 = smul.addr %s393, 4
      %s395 = scalar_lea.vmem %s2, %s394
      %p396 = scmp.lt.s32.totalorder %s20, 1
      %s397 = scalar_select %p396, %s20, 1
      %p398 = scmp.lt.s32.totalorder %s21, 0
      %s399 = scalar_select %p398, %s21, 0
      %s400 = sadd.s32 %s399, %s397
      %s401 = smul.addr %s400, 4
      %s402 = scalar_lea.vmem %s3, %s401
      // Predicated region
      $region37: #{dice_score.1} parent=27 // pred_check
        %p403 = pneg %p114
      $region38: #{dice_score.1} parent=27 // pred_check_branch
        %405 = sbr.rel (%p403) target = $region40
      $region39: #{dice_score.1} parent=27 // pred_region
        _
      $region40: #{dice_score.1} parent=27 // pred_fallthru
        _
      // Predicated region
      $region41: #{dice_score.1} parent=27 // pred_check
        %p406 = pneg %p142
      $region42: #{dice_score.1} parent=27 // pred_check_branch
        %408 = sbr.rel (%p406) target = $region44
      $region43: #{dice_score.1} parent=27 // pred_region
        _
      $region44: #{dice_score.1} parent=27 // pred_fallthru
        _
    $region28: #{dice_score.1} parent=5 // pred_fallthru
      _
    %p409 = scmp.le.s32.totalorder 2, %s10
    // Predicated region
    $region45: #{dice_score.1} parent=5 // pred_check
      %p410 = pneg %p409
    $region46: #{dice_score.1} parent=5 // pred_check_branch
      %412 = sbr.rel (%p410) target = $region48
    $region47: #{dice_score.1} parent=5 // pred_region
      %s413 = ssub.s32 %s10, 2
      // Predicated region
      $region49: #{dice_score.1} parent=47 // pred_check
        %p414 = pneg %p120
      $region50: #{dice_score.1} parent=47 // pred_check_branch
        %416 = sbr.rel (%p414) target = $region52
      $region51: #{dice_score.1} parent=47 // pred_region
        %p417 = scmp.lt.s32.totalorder %s23, 1
        %s418 = scalar_select %p417, %s23, 1
        %p419 = scmp.lt.s32.totalorder %s24, 0
        %s420 = scalar_select %p419, %s24, 0
        %s421 = sadd.s32 %s420, %s418
        %s422 = smul.addr %s421, 4
        %s423 = scalar_lea.vmem %s2, %s422
      $region52: #{dice_score.1} parent=47 // pred_fallthru
        _
      // Predicated region
      $region53: #{dice_score.1} parent=47 // pred_check
        %p424 = pneg %p148
      $region54: #{dice_score.1} parent=47 // pred_check_branch
        %426 = sbr.rel (%p424) target = $region56
      $region55: #{dice_score.1} parent=47 // pred_region
        %p427 = scmp.lt.s32.totalorder %s23, 1
        %s428 = scalar_select %p427, %s23, 1
        %p429 = scmp.lt.s32.totalorder %s24, 0
        %s430 = scalar_select %p429, %s24, 0
        %s431 = sadd.s32 %s430, %s428
        %s432 = smul.addr %s431, 4
        %s433 = scalar_lea.vmem %s3, %s432
      $region56: #{dice_score.1} parent=47 // pred_fallthru
        _
    $region48: #{dice_score.1} parent=5 // pred_fallthru
      _
  $region6: #{dice_score.1} parent=0 // loop_footer
    %s14 = sadd.s32 1, %s10
  $region7: #{dice_score.1} parent=0 // loop_footer_branch
    %9 = sbr.rel target = $region3
  $region8: #{dice_score.1} parent=0 // loop_exit
    _

</llo_original>
